<compile_context>
chip_gen: v7x
topology: tpu7x:2x2x1
jax: 0.10.0
libtpu: 0.0.40
codegen_flags: <defaults>
</compile_context>

<pallas_src>
import functools

import jax
import jax.numpy as jnp
from jax.experimental import pallas as pl
from jax.experimental.pallas import tpu as pltpu


def _attention_general_kernel(*refs, has_pad):
    # refs: ht (bt, blt, H) bf16 | hs (bt, Ls_pad, H) bf16 | w (H, H) bf16
    #       [bias (1, Ls_pad) f32 if has_pad] | out (bt, blt, Ls_pad)
    if has_pad:
        ht_ref, hs_ref, w_ref, bias_ref, o_ref = refs
    else:
        ht_ref, hs_ref, w_ref, o_ref = refs
        bias_ref = None

    bt, blt, h = ht_ref.shape

    # proj = h_t @ W as ONE flat MXU matmul (no per-batch W broadcast).
    ht_flat = ht_ref[...].reshape(bt * blt, h)
    proj = jnp.dot(ht_flat, w_ref[...], preferred_element_type=jnp.float32)
    proj = proj.astype(jnp.bfloat16).reshape(bt, blt, h)

    # s = proj @ h_s^T : transpose-free batched contraction over the last dim.
    s = jnp.einsum("btj,bsj->bts", proj, hs_ref[...],
                   preferred_element_type=jnp.float32)        # (bt, blt, Ls_pad)

    if has_pad:
        s = s + bias_ref[...]          # additive mask: 0 on real cols, -1e30 on pad

    # Softmax over the source axis (dim=2 in the PyTorch module), all f32;
    # divide goes to the EUP via approx reciprocal.
    m = jnp.max(s, axis=-1, keepdims=True)
    e = jnp.exp(s - m)
    denom = jnp.sum(e, axis=-1, keepdims=True)
    o_ref[...] = (e * pl.reciprocal(denom, approx=True)).astype(o_ref.dtype)


def _tpu_vmem_capacity_and_pref_lt():
    kind = ""
    try:
        kind = jax.devices()[0].device_kind.lower()
    except Exception:
        pass
    vmem_cap = None
    try:
        vmem_cap = int(pltpu.get_tpu_info().vmem_capacity_bytes)
    except Exception:
        vmem_cap = None
    if not vmem_cap:
        # v7x has 64 MiB VMEM per TensorCore; older generations 128 MiB.
        vmem_cap = 64 * 1024 * 1024 if "7" in kind else 128 * 1024 * 1024
    # v5e MXUs are 128x128 -> 128 rows already saturate a pass; v6e/v7x: 256.
    pref_lt = 128 if ("v5" in kind and "v5p" not in kind) else 256
    return vmem_cap, pref_lt


def attention_general(h_t, h_s, w, out_dtype=jnp.float32):
    """score='general', att_type='global' attention weights.

    h_t: (B, Lt, H) f32   h_s: (B, Ls, H) f32
    w:   (H, H)     f32   (nn.Linear(hidden, hidden, bias=False).weight)
    returns softmax(h_t @ W @ h_s^T, axis=-1) with shape (B, Lt, Ls).
    out_dtype=jnp.bfloat16 halves the (dominant) output HBM stream if the
    consumer tolerates bf16 probabilities.
    """
    b, lt, h = h_t.shape
    _, ls, _ = h_s.shape

    # bf16 MXU operands; cast BEFORE padding so the pad copy is half-size.
    h_t_bf = h_t.astype(jnp.bfloat16)
    h_s_bf = h_s.astype(jnp.bfloat16)
    w_bf = w.astype(jnp.bfloat16)

    # Lane-dense output: pad source length to a multiple of 128 (unmasked vst's).
    ls_pad = ((ls + 127) // 128) * 128
    has_pad = ls_pad != ls
    if has_pad:
        h_s_bf = jnp.pad(h_s_bf, ((0, 0), (0, ls_pad - ls), (0, 0)))
        bias = jnp.concatenate(
            [jnp.zeros((1, ls), jnp.float32),
             jnp.full((1, ls_pad - ls), -1e30, jnp.float32)], axis=1)

    vmem_cap, pref_lt = _tpu_vmem_capacity_and_pref_lt()
    vmem_limit = min(int(vmem_cap * 0.75), 100 * 1024 * 1024)   # 96MiB / 48MiB
    budget = int(vmem_limit * 0.85)
    out_itemsize = jnp.dtype(out_dtype).itemsize

    def _vmem_bytes(bt_blk, lt_blk):
        # Pallas double-buffers every BlockSpec'd operand (x2, incl. W), and
        # the body keeps f32 intermediates (proj + score/exp tiles) live.
        ht_b = bt_blk * lt_blk * h * 2
        hs_b = bt_blk * ls_pad * h * 2
        w_b = h * h * 2
        bias_b = ls_pad * 4 if has_pad else 0
        o_b = bt_blk * lt_blk * ls_pad * out_itemsize
        interm = bt_blk * lt_blk * (2 * ls_pad + h) * 4
        return 2 * (ht_b + hs_b + w_b + bias_b + o_b) + interm

    # Lt tiling: full Lt if small, else the MXU-preferred row count; shrink
    # (staying a multiple of 8) if even one batch row blows the VMEM budget.
    block_lt = lt if lt <= pref_lt else pref_lt
    while _vmem_bytes(1, block_lt) > budget and block_lt > 8:
        half = max(8, block_lt // 2)
        block_lt = half - (half % 8) if half % 8 else half
    # TODO(synk): for very long Ls the (1, Ls_pad, H) h_s block + f32 score tile
    # can still exceed VMEM (esp. v7x's 64 MiB); that needs an Ls grid axis with
    # an online (flash-style) softmax.

    # Batch packing: as many rows as fit the budget, capped so the batch grid
    # axis has >= 2 steps when B > 1 (keeps both TensorCores busy on v7x /
    # megacore without duplicating the h_s DMA on the Lt axis).
    bt_cap = b if b <= 1 else max(1, -(-b // 2))
    one = _vmem_bytes(1, block_lt)
    per_bt = max(1, _vmem_bytes(2, block_lt) - one)
    fixed = one - per_bt
    block_bt = int(max(1, min(bt_cap, (budget - fixed) // per_bt)))

    grid = (pl.cdiv(b, block_bt), pl.cdiv(lt, block_lt))

    in_specs = [
        pl.BlockSpec((block_bt, block_lt, h), lambda bi, ti: (bi, ti, 0)),
        pl.BlockSpec((block_bt, ls_pad, h), lambda bi, ti: (bi, 0, 0)),
        # Constant index_map: Pallas re-fetches only on block-index change, so W
        # is DMA'd once. TODO(synk): single-buffer W (pipeline_mode) to reclaim
        # H*H*2 bytes of VMEM once that knob is stable at the pallas_call level.
        pl.BlockSpec((h, h), lambda bi, ti: (0, 0)),
    ]
    inputs = [h_t_bf, h_s_bf, w_bf]
    if has_pad:
        in_specs.append(pl.BlockSpec((1, ls_pad), lambda bi, ti: (0, 0)))
        inputs.append(bias)

    kernel = functools.partial(_attention_general_kernel, has_pad=has_pad)

    cost = pl.CostEstimate(
        flops=2 * b * lt * h * h + 2 * b * lt * ls_pad * h,
        transcendentals=b * lt * ls_pad,
        bytes_accessed=(b * lt * h * 2 + b * ls_pad * h * 2 + h * h * 2
                        + (ls_pad * 4 if has_pad else 0)
                        + b * lt * ls_pad * out_itemsize),
    )

    out = pl.pallas_call(
        kernel,
        out_shape=jax.ShapeDtypeStruct((b, lt, ls_pad), out_dtype),
        grid_spec=pltpu.PrefetchScalarGridSpec(
            num_scalar_prefetch=0,
            grid=grid,
            in_specs=in_specs,
            out_specs=pl.BlockSpec((block_bt, block_lt, ls_pad),
                                   lambda bi, ti: (bi, ti, 0)),
        ),
        compiler_params=pltpu.CompilerParams(
            dimension_semantics=("parallel", "arbitrary"),
            vmem_limit_bytes=vmem_limit,
        ),
        cost_estimate=cost,
    )(*inputs)

    if has_pad:
        out = out[:, :, :ls]
    return out


def attention_general_ref(h_t, h_s, w):
    proj = jnp.einsum("bso,ho->bsh", h_s, w)          # h_s @ W^T
    s = jnp.einsum("bth,bsh->bts", h_t, proj)         # bmm(h_t, proj^T)
    return jax.nn.softmax(s, axis=-1)


# TODO(synk): score='dot'/'concat'/'location' branches and att_type='local_m'
# windowed masking are not exercised here; only score='general',
# att_type='global' is lowered.

if __name__ == "__main__":
    key = jax.random.PRNGKey(0)
    k1, k2, k3 = jax.random.split(key, 3)

    B, Lt, Ls, H = 2, 8, 8, 32  # batch, target len, source len, hidden
    h_t = jax.random.normal(k1, (B, Lt, H), dtype=jnp.float32)
    h_s = jax.random.normal(k2, (B, Ls, H), dtype=jnp.float32)
    # deterministic nn.Linear(H, H, bias=False) weight init (uniform +-1/sqrt(H))
    bound = 1.0 / jnp.sqrt(H)
    w = jax.random.uniform(k3, (H, H), minval=-bound, maxval=bound,
                           dtype=jnp.float32)

    out = attention_general(h_t, h_s, w)
    jax.block_until_ready(out)

    ref = attention_general_ref(h_t, h_s, w)
    assert out.shape == (B, Lt, Ls)
    # bf16 matmuls + approx reciprocal => looser tolerance vs the f32 reference.
    assert jnp.allclose(out, ref, atol=5e-2, rtol=5e-2), \
        float(jnp.max(jnp.abs(out - ref)))
    # softmax rows sum to ~1 (approx reciprocal => ~1e-3 accuracy)
    assert jnp.allclose(out.sum(-1), jnp.ones((B, Lt)), atol=1e-2)

    print("KERNEL_OK")
</pallas_src>

<mosaic_0001>
module attributes {stable_mosaic.version = 11 : i64} {
  func.func @_attention_general_kernel(%arg0: i32, %arg1: i32, %arg2: memref<1x8x32xbf16, #tpu.memory_space<vmem>>, %arg3: memref<1x128x32xbf16, #tpu.memory_space<vmem>>, %arg4: memref<32x32xbf16, #tpu.memory_space<vmem>>, %arg5: memref<1x128xf32, #tpu.memory_space<vmem>>, %arg6: memref<1x8x128xf32, #tpu.memory_space<vmem>>) attributes {dimension_semantics = [#tpu.dimension_semantics<parallel>, #tpu.dimension_semantics<arbitrary>], iteration_bounds = array<i64: 2, 1>, scalar_prefetch = 0 : i64, scratch_operands = 0 : i64, tpu.core_type = #tpu.core_type<tc>, window_params = [{transform_indices = @transform_0, window_bounds = array<i64: 1, 8, 32>}, {transform_indices = @transform_1, window_bounds = array<i64: 1, 128, 32>}, {pipeline_mode = #tpu.pipeline_mode<synchronous>, transform_indices = @transform_2, window_bounds = array<i64: 32, 32>}, {pipeline_mode = #tpu.pipeline_mode<synchronous>, transform_indices = @transform_3, window_bounds = array<i64: 1, 128>}, {transform_indices = @transform_4, window_bounds = array<i64: 1, 8, 128>}]} {
    %c0 = arith.constant 0 : index
    %c0_0 = arith.constant 0 : index
    %c0_1 = arith.constant 0 : index
    %0 = vector.load %arg2[%c0, %c0_0, %c0_1] : memref<1x8x32xbf16, #tpu.memory_space<vmem>>, vector<1x8x32xbf16>
    %1 = vector.shape_cast %0 : vector<1x8x32xbf16> to vector<8x32xbf16>
    %c0_2 = arith.constant 0 : index
    %c0_3 = arith.constant 0 : index
    %2 = vector.load %arg4[%c0_2, %c0_3] : memref<32x32xbf16, #tpu.memory_space<vmem>>, vector<32x32xbf16>
    %cst = arith.constant dense<0.000000e+00> : vector<8x32xf32>
    %3 = tpu.matmul %1, %2, %cst {dimension_numbers = #tpu.dot_dimension_numbers<[1], [0], [0], [1], [0, 0, 1, 1], [], []>} : vector<8x32xbf16>, vector<32x32xbf16>, vector<8x32xf32> -> vector<8x32xf32>
    %4 = arith.truncf %3 : vector<8x32xf32> to vector<8x32xbf16>
    %5 = vector.shape_cast %4 : vector<8x32xbf16> to vector<1x8x32xbf16>
    %c0_4 = arith.constant 0 : index
    %c0_5 = arith.constant 0 : index
    %c0_6 = arith.constant 0 : index
    %6 = vector.load %arg3[%c0_4, %c0_5, %c0_6] : memref<1x128x32xbf16, #tpu.memory_space<vmem>>, vector<1x128x32xbf16>
    "tpu.trace_start"() <{level = 10 : i32, message = "btj,bsj->bts"}> : () -> ()
    %cst_7 = arith.constant dense<0.000000e+00> : vector<1x8x128xf32>
    %7 = tpu.matmul %5, %6, %cst_7 {dimension_numbers = #tpu.dot_dimension_numbers<[2], [2], [1], [1], [0, 0, 0, 1, 1, 1], [0], [0]>} : vector<1x8x32xbf16>, vector<1x128x32xbf16>, vector<1x8x128xf32> -> vector<1x8x128xf32>
    "tpu.trace_stop"() : () -> ()
    %c0_8 = arith.constant 0 : index
    %c0_9 = arith.constant 0 : index
    %8 = vector.load %arg5[%c0_8, %c0_9] : memref<1x128xf32, #tpu.memory_space<vmem>>, vector<1x128xf32>
    %9 = vector.shape_cast %8 : vector<1x128xf32> to vector<1x1x128xf32>
    %10 = vector.broadcast %9 : vector<1x1x128xf32> to vector<1x8x128xf32>
    %11 = arith.addf %7, %10 : vector<1x8x128xf32>
    %cst_10 = arith.constant dense<0xFF800000> : vector<1x8xf32>
    %12 = vector.multi_reduction <maximumf>, %11, %cst_10 [2] : vector<1x8x128xf32> to vector<1x8xf32>
    %13 = vector.shape_cast %12 : vector<1x8xf32> to vector<1x8x1xf32>
    %14 = vector.broadcast %13 : vector<1x8x1xf32> to vector<1x8x128xf32>
    %15 = arith.subf %11, %14 : vector<1x8x128xf32>
    %16 = math.exp %15 : vector<1x8x128xf32>
    %cst_11 = arith.constant dense<0.000000e+00> : vector<1x8xf32>
    %17 = vector.multi_reduction <add>, %16, %cst_11 [2] : vector<1x8x128xf32> to vector<1x8xf32>
    %18 = vector.shape_cast %17 : vector<1x8xf32> to vector<1x8x1xf32>
    %19 = tpu.reciprocal %18 {approx = true} : vector<1x8x1xf32> -> vector<1x8x1xf32>
    %20 = vector.broadcast %19 : vector<1x8x1xf32> to vector<1x8x128xf32>
    %21 = arith.mulf %16, %20 : vector<1x8x128xf32>
    %c0_12 = arith.constant 0 : index
    %c0_13 = arith.constant 0 : index
    %c0_14 = arith.constant 0 : index
    %22 = vector.load %arg6[%c0_12, %c0_13, %c0_14] : memref<1x8x128xf32, #tpu.memory_space<vmem>>, vector<1x8x128xf32>
    tpu.vector_store %arg6[%c0_12, %c0_13, %c0_14], %21 {strides = array<i32>} : memref<1x8x128xf32, #tpu.memory_space<vmem>>, vector<1x8x128xf32>,
    return
  }
  func.func @transform_0(%arg0: i32, %arg1: i32) -> (i32, i32, i32) {
    %c0_i32 = arith.constant 0 : i32
    %c0_i32_0 = arith.constant 0 : i32
    return %arg0, %arg1, %c0_i32 : i32, i32, i32
  }
  func.func @transform_1(%arg0: i32, %arg1: i32) -> (i32, i32, i32) {
    %c0_i32 = arith.constant 0 : i32
    %c0_i32_0 = arith.constant 0 : i32
    %c0_i32_1 = arith.constant 0 : i32
    return %arg0, %c0_i32, %c0_i32_0 : i32, i32, i32
  }
  func.func @transform_2(%arg0: i32, %arg1: i32) -> (i32, i32) {
    %c0_i32 = arith.constant 0 : i32
    %c0_i32_0 = arith.constant 0 : i32
    %c0_i32_1 = arith.constant 0 : i32
    return %c0_i32, %c0_i32_0 : i32, i32
  }
  func.func @transform_3(%arg0: i32, %arg1: i32) -> (i32, i32) {
    %c0_i32 = arith.constant 0 : i32
    %c0_i32_0 = arith.constant 0 : i32
    %c0_i32_1 = arith.constant 0 : i32
    return %c0_i32, %c0_i32_0 : i32, i32
  }
  func.func @transform_4(%arg0: i32, %arg1: i32) -> (i32, i32, i32) {
    %c0_i32 = arith.constant 0 : i32
    %c0_i32_0 = arith.constant 0 : i32
    return %arg0, %arg1, %c0_i32 : i32, i32, i32
  }
}

</mosaic_0001>

<llo_original>
// kernel: tpu_custom_call.1
$region0: #{tpu_custom_call.1}
  #allocation0 [shape = 'u32[]', space=smem, size = 0x4, offset = 0x4, fixed_abs, tag = 'smem constant byte address 0x4 - core index']
  #allocation1 [shape = 'u32[144,128]{1,0:T(1,128)}', space=vmem, size = 0x12000, scoped, tag = 'internal scratch']
  %s0 = inlined_call_operand.hbm [shape: bf16[2,8,32], index: 0, kind: input, shape index: {}]
  %s1 = inlined_call_operand.hbm [shape: bf16[2,128,32], index: 1, kind: input, shape index: {}]
  %s2 = inlined_call_operand.hbm [shape: bf16[32,32], index: 2, kind: input, shape index: {}]
  %s3 = inlined_call_operand.hbm [shape: f32[1,128], index: 3, kind: input, shape index: {}]
  %s4 = inlined_call_operand.hbm [shape: f32[2,8,128], index: 4, kind: output, shape index: {}]
  %s5 = sld [smem:[#allocation0]]
  $region65: #{tpu_custom_call.1} parent=0
    _
  %s7 = ssub.s32 1, %s5
  %s8 = scalar_select 0, %s7, %s5
  $region1: #{tpu_custom_call.1} parent=0
    #allocation2 [shape = 'u8[4096]{0}', space=vmem, size = 0x1000, scoped, tag = 'input window, operand 0']
    #allocation3 [shape = 's32[2]{0}', space=sflag, size = 0x8, scoped, tag = 'scoped memory for tpu_custom_call.1']
    #allocation4 [shape = 's32[2]{0}', space=sflag, size = 0x8, scoped, tag = 'scoped memory for tpu_custom_call.1']
    #allocation5 [shape = 'u8[65536]{0}', space=vmem, size = 0x10000, scoped, tag = 'input window, operand 1']
    #allocation6 [shape = 's32[2]{0}', space=sflag, size = 0x8, scoped, tag = 'scoped memory for tpu_custom_call.1']
    #allocation7 [shape = 'u8[8192]{0}', space=vmem, size = 0x2000, scoped, tag = 'input window, operand 2, single buffered']
    #allocation8 [shape = 'u8[512]{0}', space=vmem, size = 0x400, scoped, tag = 'input window, operand 3, single buffered']
    #allocation9 [shape = 's32[1]{0}', space=sflag, size = 0x4, scoped, tag = 'scoped memory for tpu_custom_call.1']
    #allocation10 [shape = 'u8[8192]{0}', space=vmem, size = 0x2000, scoped, tag = 'output window, operand 0']
    %9 = vsyncpa [#allocation3], 0
    %s10 = scalar_lea.sflag [#allocation3], 1
    %11 = vsyncpa %s10, 0
    %12 = vsyncpa [#allocation6], 0
    %s13 = scalar_lea.sflag [#allocation6], 1
    %14 = vsyncpa %s13, 0
    %15 = vsyncpa [#allocation9], 0
    %16 = vsyncpa [#allocation4], 0
    %s17 = scalar_lea.sflag [#allocation4], 1
    %18 = vsyncpa %s17, 0
    loop: start=0, step=1, limit=4
    $region2: #{tpu_custom_call.1} parent=1 // loop_pre_header
      _
    $region3: #{tpu_custom_call.1} parent=1 // loop_header
      %s20 = sphi 0, %s24
      %p21 = scmp.ge.s32.totalorder %s20, 4
      %s27 = sphi 0, %s39
      %s28 = sphi 0, %s35
      %s29 = sphi 0, %s27
      %s30 = sphi 0, %s28
      %s31 = sphi 0, %s29
      %s32 = sphi 0, %s30
      %s44 = sphi 0, %s46
      %s47 = sphi 0, %s44
      %s48 = sphi 0, %s47
      %s64 = sphi 0, %s48
      %s70 = sphi 0, %s72
      %s73 = sphi 0, %s70
      %s74 = sphi 0, %s73
      %s90 = sphi 0, %s74
      %s94 = sphi 0, %s94
      %s96 = sphi 0, %s94
      %s97 = sphi 0, %s96
      %s111 = sphi 0, %s97
      %s115 = sphi 0, %s115
      %s117 = sphi 0, %s115
      %s118 = sphi 0, %s117
      %s132 = sphi 0, %s118
      %s140 = sphi 0, %s142
      %s143 = sphi 0, %s140
      %s144 = sphi 0, %s143
      %s160 = sphi 0, %s144
    $region4: #{tpu_custom_call.1} parent=1 // loop_header_branch
      %23 = sbr.rel (%p21) target = $region8
    $region5: #{tpu_custom_call.1} parent=1 // loop_body
      %s25 = ssub.s32 %s20, 1
      %s26 = ssub.s32 %s20, 2
      %s33 = sadd.s32 1, %s28
      %p34 = scmp.ge.s32.totalorder %s33, 1
      %s35 = scalar_select %p34, 0, %s33
      %s36 = sadd.s32 1, %s27
      %s37 = scalar_select %p34, %s36, %s27
      %p38 = scmp.ge.s32.totalorder %s37, 2
      %s39 = scalar_select %p38, 0, %s37
      %s40 = ssub.s32 %s27, %s39
      %s41 = ssub.s32 %s28, %s35
      %s42 = sor.u32 %s40, %s41
      %p43 = scmp.eq.s32.totalorder %s42, 0
      %s45 = sadd.s32 %s44, 1
      %s46 = scalar_select %p43, %s44, %s45
      %p49 = pneg %p43
      %p50 = scmp.eq.s32.totalorder %s20, 1
      %p51 = por %p49, %p50
      %p52 = scmp.ne.s32.totalorder %s44, %s47
      %p53 = scmp.eq.s32.totalorder %s20, 0
      %p54 = por %p52, %p53
      %p55 = scmp.ne.s32.totalorder %s44, %s47
      %p56 = scmp.eq.s32.totalorder %s25, 1
      %p57 = por %p55, %p56
      %p58 = scmp.ne.s32.totalorder %s47, %s48
      %p59 = scmp.eq.s32.totalorder %s25, 0
      %p60 = por %p58, %p59
      %p61 = scmp.ne.s32.totalorder %s47, %s48
      %p62 = scmp.eq.s32.totalorder %s26, 1
      %p63 = por %p61, %p62
      %p65 = scmp.ne.s32.totalorder %s48, %s64
      %p66 = scmp.eq.s32.totalorder %s26, 0
      %p67 = por %p65, %p66
      %s68 = ssub.s32 %s27, %s39
      %p69 = scmp.eq.s32.totalorder %s68, 0
      %s71 = sadd.s32 %s70, 1
      %s72 = scalar_select %p69, %s70, %s71
      %p75 = pneg %p69
      %p76 = scmp.eq.s32.totalorder %s20, 1
      %p77 = por %p75, %p76
      %p78 = scmp.ne.s32.totalorder %s70, %s73
      %p79 = scmp.eq.s32.totalorder %s20, 0
      %p80 = por %p78, %p79
      %p81 = scmp.ne.s32.totalorder %s70, %s73
      %p82 = scmp.eq.s32.totalorder %s25, 1
      %p83 = por %p81, %p82
      %p84 = scmp.ne.s32.totalorder %s73, %s74
      %p85 = scmp.eq.s32.totalorder %s25, 0
      %p86 = por %p84, %p85
      %p87 = scmp.ne.s32.totalorder %s73, %s74
      %p88 = scmp.eq.s32.totalorder %s26, 1
      %p89 = por %p87, %p88
      %p91 = scmp.ne.s32.totalorder %s74, %s90
      %p92 = scmp.eq.s32.totalorder %s26, 0
      %p93 = por %p91, %p92
      %s95 = sadd.s32 %s94, 1
      %p98 = scmp.eq.s32.totalorder %s20, 1
      %p99 = scmp.ne.s32.totalorder %s94, %s96
      %p100 = scmp.eq.s32.totalorder %s20, 0
      %p101 = por %p99, %p100
      %p102 = scmp.ne.s32.totalorder %s94, %s96
      %p103 = scmp.eq.s32.totalorder %s25, 1
      %p104 = por %p102, %p103
      %p105 = scmp.ne.s32.totalorder %s96, %s97
      %p106 = scmp.eq.s32.totalorder %s25, 0
      %p107 = por %p105, %p106
      %p108 = scmp.ne.s32.totalorder %s96, %s97
      %p109 = scmp.eq.s32.totalorder %s26, 1
      %p110 = por %p108, %p109
      %p112 = scmp.ne.s32.totalorder %s97, %s111
      %p113 = scmp.eq.s32.totalorder %s26, 0
      %p114 = por %p112, %p113
      %s116 = sadd.s32 %s115, 1
      %p119 = scmp.eq.s32.totalorder %s20, 1
      %p120 = scmp.ne.s32.totalorder %s115, %s117
      %p121 = scmp.eq.s32.totalorder %s20, 0
      %p122 = por %p120, %p121
      %p123 = scmp.ne.s32.totalorder %s115, %s117
      %p124 = scmp.eq.s32.totalorder %s25, 1
      %p125 = por %p123, %p124
      %p126 = scmp.ne.s32.totalorder %s117, %s118
      %p127 = scmp.eq.s32.totalorder %s25, 0
      %p128 = por %p126, %p127
      %p129 = scmp.ne.s32.totalorder %s117, %s118
      %p130 = scmp.eq.s32.totalorder %s26, 1
      %p131 = por %p129, %p130
      %p133 = scmp.ne.s32.totalorder %s118, %s132
      %p134 = scmp.eq.s32.totalorder %s26, 0
      %p135 = por %p133, %p134
      %s136 = ssub.s32 %s27, %s39
      %s137 = ssub.s32 %s28, %s35
      %s138 = sor.u32 %s136, %s137
      %p139 = scmp.eq.s32.totalorder %s138, 0
      %s141 = sadd.s32 %s140, 1
      %s142 = scalar_select %p139, %s140, %s141
      %p145 = pneg %p139
      %p146 = scmp.eq.s32.totalorder %s20, 1
      %p147 = por %p145, %p146
      %p148 = scmp.ne.s32.totalorder %s140, %s143
      %p149 = scmp.eq.s32.totalorder %s20, 0
      %p150 = por %p148, %p149
      %p151 = scmp.ne.s32.totalorder %s140, %s143
      %p152 = scmp.eq.s32.totalorder %s25, 1
      %p153 = por %p151, %p152
      %p154 = scmp.ne.s32.totalorder %s143, %s144
      %p155 = scmp.eq.s32.totalorder %s25, 0
      %p156 = por %p154, %p155
      %p157 = scmp.ne.s32.totalorder %s143, %s144
      %p158 = scmp.eq.s32.totalorder %s26, 1
      %p159 = por %p157, %p158
      %p161 = scmp.ne.s32.totalorder %s144, %s160
      %p162 = scmp.eq.s32.totalorder %s26, 0
      %p163 = por %p161, %p162
      %p164 = scmp.le.s32.totalorder 1, %s20
      %p165 = scmp.lt.s32.totalorder %s20, 3
      %p166 = pnand %p164, %p165
      %p167 = pneg %p166
      // Predicated region
      $region9: #{tpu_custom_call.1} parent=5 // pred_check
        _
      $region10: #{tpu_custom_call.1} parent=5 // pred_check_branch
        %169 = sbr.rel (%p166) target = $region12
      $region11: #{tpu_custom_call.1} parent=5 // pred_region
        %s170 = ssub.s32 %s20, 1
        // Predicated region
        $region13: #{tpu_custom_call.1} parent=11 // pred_check
          %p171 = pneg %p107
        $region14: #{tpu_custom_call.1} parent=11 // pred_check_branch
          %173 = sbr.rel (%p171) target = $region16
        $region15: #{tpu_custom_call.1} parent=11 // pred_region
          %s175 = ssub.s32 256, 256
          %176 = vsyncadd [#allocation6], %s175
          %s177 = sshll.u32 [#allocation7], 4
          %s178 = int_to_ptr.vmem [resolvable:$true] %s177
          %183 = dma.hbm_to_vmem [thread:$0]  %s2, 256, %s178, [#allocation6], 64, 64, 4
        $region16: #{tpu_custom_call.1} parent=11 // pred_fallthru
          _
        // Predicated region
        $region17: #{tpu_custom_call.1} parent=11 // pred_check
          %p184 = pneg %p128
        $region18: #{tpu_custom_call.1} parent=11 // pred_check_branch
          %186 = sbr.rel (%p184) target = $region20
        $region19: #{tpu_custom_call.1} parent=11 // pred_region
          %s188 = ssub.s32 16, 16
          %189 = vsyncadd [#allocation9], %s188
          %s191 = sshll.u32 [#allocation8], 4
          %s192 = int_to_ptr.vmem [resolvable:$true] %s191
          %194 = dma.hbm_to_vmem [thread:$0]  %s3, 16, %s192, [#allocation9]
        $region20: #{tpu_custom_call.1} parent=11 // pred_fallthru
          _
      $region12: #{tpu_custom_call.1} parent=5 // pred_fallthru
        _
      %p195 = scmp.lt.s32.totalorder %s20, 2
      // Predicated region
      $region21: #{tpu_custom_call.1} parent=5 // pred_check
        %p196 = pneg %p195
      $region22: #{tpu_custom_call.1} parent=5 // pred_check_branch
        %198 = sbr.rel (%p196) target = $region24
      $region23: #{tpu_custom_call.1} parent=5 // pred_region
        // Predicated region
        $region25: #{tpu_custom_call.1} parent=23 // pred_check
          %p199 = pneg %p54
        $region26: #{tpu_custom_call.1} parent=23 // pred_check_branch
          %201 = sbr.rel (%p199) target = $region28
        $region27: #{tpu_custom_call.1} parent=23 // pred_region
          %s202 = sand.u32 %s44, 1
          %s203 = scalar_lea.sflag [#allocation3], %s202
          %s204 = sand.u32 %s44, 1
          %s205 = smul.addr %s204, 4
          %s206 = scalar_lea.vmem [#allocation2], %s205
          %s208 = ssub.s32 64, 64
          %209 = vsyncadd %s203, %s208
          %s210 = sadd.s32 %s28, %s27
          %s211 = smul.addr %s210, 64
          %s212 = scalar_lea.hbm %s0, %s211
          %s214 = sshll.u32 %s206, 4
          %s215 = int_to_ptr.vmem [resolvable:$true] %s214
          %217 = dma.hbm_to_vmem [thread:$0]  %s212, 64, %s215, %s203
        $region28: #{tpu_custom_call.1} parent=23 // pred_fallthru
          _
        // Predicated region
        $region29: #{tpu_custom_call.1} parent=23 // pred_check
          %p218 = pneg %p80
        $region30: #{tpu_custom_call.1} parent=23 // pred_check_branch
          %220 = sbr.rel (%p218) target = $region32
        $region31: #{tpu_custom_call.1} parent=23 // pred_region
          %s221 = sand.u32 %s20, 1
          %s222 = scalar_lea.sflag [#allocation6], %s221
          %s223 = sand.u32 %s70, 1
          %s224 = smul.addr %s223, 64
          %s225 = scalar_lea.vmem [#allocation5], %s224
          %s227 = ssub.s32 1024, 1024
          %228 = vsyncadd %s222, %s227
          %s229 = smul.addr %s27, 16
          %s230 = smul.addr %s229, 64
          %s231 = scalar_lea.hbm %s1, %s230
          %s232 = sshll.u32 %s225, 4
          %s233 = int_to_ptr.vmem [resolvable:$true] %s232
          %238 = dma.hbm_to_vmem [thread:$0]  %s231, 1024, %s233, %s222, 64, 64, 4
        $region32: #{tpu_custom_call.1} parent=23 // pred_fallthru
          _
      $region24: #{tpu_custom_call.1} parent=5 // pred_fallthru
        _
      %p239 = scmp.le.s32.totalorder 1, %s20
      %p240 = scmp.lt.s32.totalorder %s20, 3
      %p241 = pnand %p239, %p240
      %p242 = pneg %p241
      // Predicated region
      $region33: #{tpu_custom_call.1} parent=5 // pred_check
        _
      $region34: #{tpu_custom_call.1} parent=5 // pred_check_branch
        %244 = sbr.rel (%p241) target = $region36
      $region35: #{tpu_custom_call.1} parent=5 // pred_region
        %s245 = ssub.s32 %s20, 1
        %s246 = sand.u32 %s47, 1
        %s247 = scalar_lea.sflag [#allocation3], %s246
        %s248 = sand.u32 %s47, 1
        %s249 = smul.addr %s248, 4
        %s250 = scalar_lea.vmem [#allocation2], %s249
        // Predicated region
        $region37: #{tpu_custom_call.1} parent=35 // pred_check
          %p251 = pneg %p60
        $region38: #{tpu_custom_call.1} parent=35 // pred_check_branch
          %253 = sbr.rel (%p251) target = $region40
        $region39: #{tpu_custom_call.1} parent=35 // pred_region
          %254 = dma.done %s247, 64
        $region40: #{tpu_custom_call.1} parent=35 // pred_fallthru
          _
        %s255 = sand.u32 %s25, 1
        %s256 = scalar_lea.sflag [#allocation6], %s255
        %s257 = sand.u32 %s73, 1
        %s258 = smul.addr %s257, 64
        %s259 = scalar_lea.vmem [#allocation5], %s258
        // Predicated region
        $region41: #{tpu_custom_call.1} parent=35 // pred_check
          %p260 = pneg %p86
        $region42: #{tpu_custom_call.1} parent=35 // pred_check_branch
          %262 = sbr.rel (%p260) target = $region44
        $region43: #{tpu_custom_call.1} parent=35 // pred_region
          %263 = dma.done %s256, 1024
        $region44: #{tpu_custom_call.1} parent=35 // pred_fallthru
          _
        // Predicated region
        $region45: #{tpu_custom_call.1} parent=35 // pred_check
          %p264 = pneg %p107
        $region46: #{tpu_custom_call.1} parent=35 // pred_check_branch
          %266 = sbr.rel (%p264) target = $region48
        $region47: #{tpu_custom_call.1} parent=35 // pred_region
          %267 = dma.done [#allocation6], 256
        $region48: #{tpu_custom_call.1} parent=35 // pred_fallthru
          _
        // Predicated region
        $region49: #{tpu_custom_call.1} parent=35 // pred_check
          %p268 = pneg %p128
        $region50: #{tpu_custom_call.1} parent=35 // pred_check_branch
          %270 = sbr.rel (%p268) target = $region52
        $region51: #{tpu_custom_call.1} parent=35 // pred_region
          %271 = dma.done [#allocation9], 16
        $region52: #{tpu_custom_call.1} parent=35 // pred_fallthru
          _
        %s272 = sand.u32 %s47, 1
        %s273 = scalar_lea.sflag [#allocation3], %s272
        %s274 = sand.u32 %s47, 1
        %s275 = smul.addr %s274, 4
        %s276 = scalar_lea.vmem [#allocation2], %s275
        %p277 = pneg %p60
        %p278 = pneg %p57
        %s279 = sand.u32 %s25, 1
        %s280 = scalar_lea.sflag [#allocation6], %s279
        %s281 = sand.u32 %s73, 1
        %s282 = smul.addr %s281, 64
        %s283 = scalar_lea.vmem [#allocation5], %s282
        %p284 = pneg %p86
        %p285 = pneg %p83
        %p286 = pneg %p107
        %p287 = pneg %p104
        %p288 = pneg %p128
        %p289 = pneg %p125
        %p290 = pneg %p156
        %p291 = pneg %p153
        %s292 = sand.u32 %s143, 1
        %s293 = scalar_lea.sflag [#allocation4], %s292
        %s294 = sand.u32 %s143, 1
        %s295 = smul.addr %s294, 8
        %s296 = scalar_lea.vmem [#allocation10], %s295
        %v298 = vld [vmem:[%s250] sm:$0xf]
        %v299 = vld [vmem:[#allocation7] sm:$0xf]
        %v300 = vld [vmem:[#allocation7 + $0x4] sm:$0xf]
        %v301 = vld [vmem:[#allocation7 + $0x8] sm:$0xf]
        %v302 = vld [vmem:[#allocation7 + $0xc] sm:$0xf]
        %v307 = vunpack.c.l.b16 %v299
        %v308 = vunpack.c.l.b16 %v300
        %v309 = vunpack.c.l.b16 %v301
        %v310 = vunpack.c.l.b16 %v302
        %v311 = vpack.c.b16 %v308, %v307
        %v312 = vpack.c.b16 %v310, %v309
        %vm315 = vcmask 261120
        %v317 = vsel %vm315, %v298, 0
        %319 = vmatprep.subr.bf16.mxu0 0
        %320 = vmatpush1.bf16.msra.mxu0 %v311
        %321 = vmatprep.subr.bf16.mxu0 0
        %322 = vmatpush1.bf16.msra.mxu0 %v312
        %323 = vmatprep.subr.bf16.mxu0 0
        %324 = vmatpush1.bf16.msra.mxu0 0
        %325 = vmatprep.subr.bf16.mxu0 0
        %326 = vmatpush1.bf16.msra.mxu0 0
        %327 = vmatprep.subr.bf16.mxu0 0
        %328 = vmatpush1.bf16.msra.mxu0 0
        %329 = vmatprep.subr.bf16.mxu0 0
        %330 = vmatpush1.bf16.msra.mxu0 0
        %331 = vmatprep.subr.bf16.mxu0 0
        %332 = vmatpush1.bf16.msra.mxu0 0
        %333 = vmatprep.subr.bf16.mxu0 0
        %334 = vmatpush1.bf16.msra.mxu0 0
        %335 = vmatprep.subr.bf16.mxu0 0
        %336 = vmatpush1.bf16.msra.mxu0 0
        %337 = vmatprep.subr.bf16.mxu0 0
        %338 = vmatpush1.bf16.msra.mxu0 0
        %339 = vmatprep.subr.bf16.mxu0 0
        %340 = vmatpush1.bf16.msra.mxu0 0
        %341 = vmatprep.subr.bf16.mxu0 0
        %342 = vmatpush1.bf16.msra.mxu0 0
        %343 = vmatprep.subr.bf16.mxu0 0
        %344 = vmatpush1.bf16.msra.mxu0 0
        %345 = vmatprep.subr.bf16.mxu0 0
        %346 = vmatpush1.bf16.msra.mxu0 0
        %347 = vmatprep.subr.bf16.mxu0 0
        %348 = vmatpush1.bf16.msra.mxu0 0
        %349 = vmatprep.subr.bf16.mxu0 0
        %350 = vmatpush1.bf16.msra.mxu0 0
        %351 = vmatprep.mubr.bf16.mxu0 0
        %352 = vmatmul.mubr.bf16.gmra.mrb[0].mxu0 %v317
        %v353 = vpop.f32.mrb[0].mxu0
        %v354 = vadd.f32 0.0, %v353
        %v355 = vpop.f32.mrb[0].mxu0
        %v356 = vpop.f32.mrb[0].mxu0
        %v357 = vpop.f32.mrb[0].mxu0
        %358 = vdwg.mxu0
        %v359 = vpack.c.bf16 %v354, %v354
        %v360 = vld [vmem:[%s259] sm:$0xf]
        %v361 = vld [vmem:[%s259 + $0x4] sm:$0xf]
        %v362 = vld [vmem:[%s259 + $0x8] sm:$0xf]
        %v363 = vld [vmem:[%s259 + $0xc] sm:$0xf]
        %v364 = vld [vmem:[%s259 + $0x10] sm:$0xf]
        %v365 = vld [vmem:[%s259 + $0x14] sm:$0xf]
        %v366 = vld [vmem:[%s259 + $0x18] sm:$0xf]
        %v367 = vld [vmem:[%s259 + $0x1c] sm:$0xf]
        %v368 = vld [vmem:[%s259 + $0x20] sm:$0xf]
        %v369 = vld [vmem:[%s259 + $0x24] sm:$0xf]
        %v370 = vld [vmem:[%s259 + $0x28] sm:$0xf]
        %v371 = vld [vmem:[%s259 + $0x2c] sm:$0xf]
        %v372 = vld [vmem:[%s259 + $0x30] sm:$0xf]
        %v373 = vld [vmem:[%s259 + $0x34] sm:$0xf]
        %v374 = vld [vmem:[%s259 + $0x38] sm:$0xf]
        %v375 = vld [vmem:[%s259 + $0x3c] sm:$0xf]
        %v376 = vld [vmem:[#allocation8] sm:$0x1]
        %v378 = vlaneseq
        %v379 = vshrl.u32 %v378, 7
        %v380 = vsub.s32 0, %v379
        %v381 = vrot.slane %v376, %v380
        %v399 = vunpack.c.l.b16 %v360
        %v400 = vunpack.c.l.b16 %v361
        %v401 = vunpack.c.l.b16 %v362
        %v402 = vunpack.c.l.b16 %v363
        %v403 = vunpack.c.l.b16 %v364
        %v404 = vunpack.c.l.b16 %v365
        %v405 = vunpack.c.l.b16 %v366
        %v406 = vunpack.c.l.b16 %v367
        %v407 = vunpack.c.l.b16 %v368
        %v408 = vunpack.c.l.b16 %v369
        %v409 = vunpack.c.l.b16 %v370
        %v410 = vunpack.c.l.b16 %v371
        %v411 = vunpack.c.l.b16 %v372
        %v412 = vunpack.c.l.b16 %v373
        %v413 = vunpack.c.l.b16 %v374
        %v414 = vunpack.c.l.b16 %v375
        %v415 = vpack.c.b16 %v400, %v399
        %v416 = vpack.c.b16 %v402, %v401
        %v417 = vpack.c.b16 %v404, %v403
        %v418 = vpack.c.b16 %v406, %v405
        %v419 = vpack.c.b16 %v408, %v407
        %v420 = vpack.c.b16 %v410, %v409
        %v421 = vpack.c.b16 %v412, %v411
        %v422 = vpack.c.b16 %v414, %v413
        %v424 = vsel %vm315, %v359, 0
        %v427 = vsel %vm315, %v415, 0
        %v430 = vsel %vm315, %v416, 0
        %v433 = vsel %vm315, %v417, 0
        %v436 = vsel %vm315, %v418, 0
        %v439 = vsel %vm315, %v419, 0
        %v442 = vsel %vm315, %v420, 0
        %v445 = vsel %vm315, %v421, 0
        %v448 = vsel %vm315, %v422, 0
        %450 = vmatprep.subr.bf16.mxu0 0
        %451 = vmatpush1.bf16.xpose.msra.mxu0 %v427
        %452 = vmatprep.subr.bf16.mxu0 0
        %453 = vmatpush1.bf16.xpose.msra.mxu0 %v430
        %454 = vmatprep.subr.bf16.mxu0 0
        %455 = vmatpush1.bf16.xpose.msra.mxu0 %v433
        %456 = vmatprep.subr.bf16.mxu0 0
        %457 = vmatpush1.bf16.xpose.msra.mxu0 %v436
        %458 = vmatprep.subr.bf16.mxu0 0
        %459 = vmatpush1.bf16.xpose.msra.mxu0 %v439
        %460 = vmatprep.subr.bf16.mxu0 0
        %461 = vmatpush1.bf16.xpose.msra.mxu0 %v442
        %462 = vmatprep.subr.bf16.mxu0 0
        %463 = vmatpush1.bf16.xpose.msra.mxu0 %v445
        %464 = vmatprep.subr.bf16.mxu0 0
        %465 = vmatpush1.bf16.xpose.msra.mxu0 %v448
        %466 = vmatprep.subr.bf16.mxu0 0
        %467 = vmatpush1.bf16.xpose.msra.mxu0 0
        %468 = vmatprep.subr.bf16.mxu0 0
        %469 = vmatpush1.bf16.xpose.msra.mxu0 0
        %470 = vmatprep.subr.bf16.mxu0 0
        %471 = vmatpush1.bf16.xpose.msra.mxu0 0
        %472 = vmatprep.subr.bf16.mxu0 0
        %473 = vmatpush1.bf16.xpose.msra.mxu0 0
        %474 = vmatprep.subr.bf16.mxu0 0
        %475 = vmatpush1.bf16.xpose.msra.mxu0 0
        %476 = vmatprep.subr.bf16.mxu0 0
        %477 = vmatpush1.bf16.xpose.msra.mxu0 0
        %478 = vmatprep.subr.bf16.mxu0 0
        %479 = vmatpush1.bf16.xpose.msra.mxu0 0
        %480 = vmatprep.subr.bf16.mxu0 0
        %481 = vmatpush1.bf16.xpose.msra.mxu0 0
        %482 = vmatprep.mubr.bf16.mxu0 0
        %483 = vmatmul.mubr.bf16.gmra.mrb[0].mxu0 %v424
        %v484 = vpop.f32.mrb[0].mxu0
        %v485 = vadd.f32 %v381, %v484
        %v486 = vpop.f32.mrb[0].mxu0
        %v487 = vpop.f32.mrb[0].mxu0
        %v488 = vpop.f32.mrb[0].mxu0
        %489 = vdwg.mxu0
        %490 = vmax.xlane.f32.xlu0 %v485
        %v491 = vpop.xlane.xlu0 %490
        %v492 = vsub.f32 %v485, %v491
        %v493 = vmul.f32 %v492, 1.442695
        %v494 = vpow.pop %v493
        %495 = vadd.xlane.f32.xlu0 %v494
        %v496 = vpop.xlane.xlu0 %495
        %v497 = vrcp.pop %v496
        %v498 = vmul.f32 %v494, %v497
        %499 = vst [vmem:[%s296] sm:$0xff] %v498
        %s500 = sand.u32 %s143, 1
        %s501 = scalar_lea.sflag [#allocation4], %s500
        %s502 = sand.u32 %s143, 1
        %s503 = smul.addr %s502, 8
        %s504 = scalar_lea.vmem [#allocation10], %s503
        // Predicated region
        $region53: #{tpu_custom_call.1} parent=35 // pred_check
          %p505 = pneg %p153
        $region54: #{tpu_custom_call.1} parent=35 // pred_check_branch
          %507 = sbr.rel (%p505) target = $region56
        $region55: #{tpu_custom_call.1} parent=35 // pred_region
          %s509 = ssub.s32 128, 128
          %510 = vsyncadd %s501, %s509
          %s511 = sadd.s32 %s30, %s29
          %s512 = smul.addr %s511, 128
          %s513 = scalar_lea.hbm %s4, %s512
          %s515 = sshll.u32 %s504, 4
          %s516 = int_to_ptr.vmem [resolvable:$true] %s515
          %518 = dma.vmem_to_hbm [thread:$0]  %s516, 128, %s513, %s501
        $region56: #{tpu_custom_call.1} parent=35 // pred_fallthru
          _
      $region36: #{tpu_custom_call.1} parent=5 // pred_fallthru
        _
      %p519 = scmp.le.s32.totalorder 2, %s20
      // Predicated region
      $region57: #{tpu_custom_call.1} parent=5 // pred_check
        %p520 = pneg %p519
      $region58: #{tpu_custom_call.1} parent=5 // pred_check_branch
        %522 = sbr.rel (%p520) target = $region60
      $region59: #{tpu_custom_call.1} parent=5 // pred_region
        %s523 = ssub.s32 %s20, 2
        // Predicated region
        $region61: #{tpu_custom_call.1} parent=59 // pred_check
          %p524 = pneg %p159
        $region62: #{tpu_custom_call.1} parent=59 // pred_check_branch
          %526 = sbr.rel (%p524) target = $region64
        $region63: #{tpu_custom_call.1} parent=59 // pred_region
          %s527 = sand.u32 %s144, 1
          %s528 = scalar_lea.sflag [#allocation4], %s527
          %s529 = sand.u32 %s144, 1
          %s530 = smul.addr %s529, 8
          %s531 = scalar_lea.vmem [#allocation10], %s530
          %532 = dma.done %s528, 128
        $region64: #{tpu_custom_call.1} parent=59 // pred_fallthru
          _
      $region60: #{tpu_custom_call.1} parent=5 // pred_fallthru
        _
    $region6: #{tpu_custom_call.1} parent=1 // loop_footer
      %s24 = sadd.s32 1, %s20
    $region7: #{tpu_custom_call.1} parent=1 // loop_footer_branch
      %19 = sbr.rel target = $region3
    $region8: #{tpu_custom_call.1} parent=1 // loop_exit
      _
    %533 = vsyncpa [#allocation3], 1
    %s534 = scalar_lea.sflag [#allocation3], 1
    %535 = vsyncpa %s534, 1
    %536 = vsyncpa [#allocation6], 1
    %s537 = scalar_lea.sflag [#allocation6], 1
    %538 = vsyncpa %s537, 1
    %539 = vsyncpa [#allocation9], 1
    %540 = vsyncpa [#allocation4], 1
    %s541 = scalar_lea.sflag [#allocation4], 1
    %542 = vsyncpa %s541, 1

</llo_original>
